<compile_context>
chip_gen: v7x
topology: tpu7x:2x2x1
jax: 0.10.0
libtpu: 0.0.40
codegen_flags: <defaults>
</compile_context>

<pallas_src>
import functools

import numpy as np
import jax
import jax.numpy as jnp
from jax import lax
from jax.experimental import pallas as pl
from jax.experimental.pallas import tpu as pltpu

LANES = 128
FUSE_MAX_BYTES = 2 << 20        # whole-slab single-block kernel below this (no pipelining needed)
CACHED_TILE_BYTES = 512 << 10   # tile size inside the cached two-phase kernel (keeps DMA/compute overlapped)
STREAM_TILE_BYTES = 2 << 20     # tile size for the big streaming path
_FALLBACK_VMEM_BYTES = 64 << 20  # conservative (v7x per-TC VMEM) if get_tpu_info is unavailable


def _auto_prune_param(x: float) -> float:
    # softplus(log(exp(x) - 1)) — torch's auto_prune parameterization, emulated with a
    # float32 roundtrip (mathematically the identity). Constant-folded in Python.
    x32 = np.float32(x)
    inv = np.float32(np.log(np.expm1(x32)))
    return float(np.float32(np.log1p(np.exp(inv))))


def _gen_aware_limits():
    """(cache_cap_bytes, vmem_limit_bytes) derived from the chip's VMEM capacity."""
    try:
        vmem = int(pltpu.get_tpu_info().vmem_capacity_bytes)
    except Exception:
        vmem = _FALLBACK_VMEM_BYTES
    cache_cap = max(16 << 20, vmem // 2 - (8 << 20))          # 24 MiB on v7x, ~56 MiB on v5e/v6e
    vmem_limit = min(vmem - (8 << 20), cache_cap + (16 << 20))  # headroom for double buffers + scratch
    return cache_cap, vmem_limit


def _choose_block_rows(itemsize: int, target_bytes: int) -> int:
    r = max(1, target_bytes // (LANES * itemsize))
    return int(max(8, (r // 8) * 8))


def _apply_mask(wf, inv_mg, aob, beta, ratio, eps):
    log_w = jnp.log(jnp.maximum(eps, jnp.abs(wf) * inv_mg))
    log_w = jnp.minimum(ratio, beta * log_w)
    mask = jnp.maximum(aob * log_w, log_w)
    return wf * mask


# ---------------------------------------------------------------------------
# Kernels
# ---------------------------------------------------------------------------
def _fused_kernel(params_ref, w_ref, o_ref):
    # params (SMEM f32[5]): [alpha/beta, beta, ratio, eps, n/gamma]
    aob = params_ref[0]
    beta = params_ref[1]
    ratio = params_ref[2]
    eps = params_ref[3]
    n_over_gamma = params_ref[4]

    wf = w_ref[...].astype(jnp.float32)
    inv_mg = n_over_gamma / jnp.sum(jnp.abs(wf))   # 1 / (mean(|w|) * gamma); zero-pad adds 0
    o_ref[...] = _apply_mask(wf, inv_mg, aob, beta, ratio, eps).astype(o_ref.dtype)


def _cached_kernel(params_ref, dims_ref, w_ref, o_ref, cache_ref, acc_ref, *, block_rows):
    # grid = (2, nblk): phase 0 = stream + cache + partial |w| sums, phase 1 = mask + write.
    p = pl.program_id(0)
    i = pl.program_id(1)

    @pl.when(p == 0)
    def _phase0():
        @pl.when(i == 0)
        def _init():
            acc_ref[...] = jnp.zeros_like(acc_ref)

        wv = w_ref[...]
        cache_ref[i] = wv                                   # stash raw block in VMEM cache
        wa = jnp.abs(wv.astype(jnp.float32))
        rid = i * block_rows + lax.broadcasted_iota(jnp.int32, wa.shape, 0)
        wa = jnp.where(rid < dims_ref[0], wa, 0.0)          # mask ragged / OOB rows of last block
        acc_ref[...] += jnp.sum(wa, axis=0, keepdims=True)  # (1,128) partial; XLU reduce deferred

    @pl.when(p == 1)
    def _phase1():
        inv_mg = params_ref[4] / jnp.sum(acc_ref[...])      # n/gamma / sum(|w|) = 1/(mean*gamma)
        wf = cache_ref[i].astype(jnp.float32)               # no 2nd HBM read
        o_ref[...] = _apply_mask(
            wf, inv_mg, params_ref[0], params_ref[1], params_ref[2], params_ref[3]
        ).astype(o_ref.dtype)


def _partial_abs_sum_kernel(dims_ref, w_ref, out_ref, *, block_rows):
    # Per-block partial sum(|w|) -> (1,1,128); blocks independent => "parallel" (megacore).
    i = pl.program_id(0)
    wa = jnp.abs(w_ref[...].astype(jnp.float32))
    rid = i * block_rows + lax.broadcasted_iota(jnp.int32, wa.shape, 0)
    wa = jnp.where(rid < dims_ref[0], wa, 0.0)
    out_ref[...] = jnp.sum(wa, axis=0, keepdims=True).reshape(1, 1, LANES)


def _mask_kernel(params_ref, total_ref, w_ref, o_ref):
    # params (SMEM f32[5]): [alpha/beta, beta, ratio, eps, n/gamma]; total (SMEM f32[1]) = sum(|w|)
    inv_mg = params_ref[4] / total_ref[0]                   # scalar divide per step (free)
    wf = w_ref[...].astype(jnp.float32)
    o_ref[...] = _apply_mask(
        wf, inv_mg, params_ref[0], params_ref[1], params_ref[2], params_ref[3]
    ).astype(o_ref.dtype)


# ---------------------------------------------------------------------------
# Wrapper
# ---------------------------------------------------------------------------
@functools.partial(
    jax.jit, static_argnames=("alpha", "beta", "gamma", "max_ratio", "eps", "path")
)
def pruner_forward(w, *, alpha=0.01, beta=1.0, gamma=1.0, max_ratio=1.0, eps=1e-12, path=None):
    """auto_prune forward of cflearn's Pruner (default config)."""
    alpha_v = _auto_prune_param(alpha)
    beta_v = _auto_prune_param(beta)
    gamma_v = _auto_prune_param(gamma)
    ratio_v = _auto_prune_param(max_ratio)
    aob = alpha_v / beta_v

    orig_shape = w.shape
    orig_dtype = w.dtype
    n = int(np.prod(orig_shape))
    itemsize = jnp.dtype(orig_dtype).itemsize

    rows = -(-n // LANES)
    slab_bytes = rows * LANES * itemsize
    cache_cap, vmem_limit = _gen_aware_limits()

    if path is None:
        if slab_bytes <= FUSE_MAX_BYTES:
            path = "fuse"
        elif slab_bytes <= cache_cap:
            path = "cached"
        else:
            path = "stream"

    # Lane-dense layout.  Only the fused whole-slab path pads rows to a multiple of 8; the
    # tiled paths run the last block ragged and mask it in-kernel (no pad / no slice copies
    # when n % 128 == 0).
    rows_pad = (-(-rows // 8) * 8) if path == "fuse" else rows
    padded_n = rows_pad * LANES
    flat = w.reshape(-1)
    if padded_n != n:
        # TODO(synk): for n % 128 != 0 this lane pad (and the trailing slice) still cost one
        # extra HBM copy each; a 1-D ragged-tail kernel would remove them.
        flat = jnp.pad(flat, (0, padded_n - n))
    w2 = flat.reshape(rows_pad, LANES)

    params = jnp.array(
        [aob, beta_v, ratio_v, float(eps), float(n) / gamma_v], dtype=jnp.float32
    )
    dims = jnp.array([rows], dtype=jnp.int32)   # number of valid rows (for ragged-tail masking)
    smem_spec = pl.BlockSpec(memory_space=pltpu.MemorySpace.SMEM)

    if path == "fuse":
        out2 = pl.pallas_call(
            _fused_kernel,
            out_shape=jax.ShapeDtypeStruct((rows_pad, LANES), orig_dtype),
            grid=(1,),
            in_specs=[smem_spec, pl.BlockSpec((rows_pad, LANES), lambda i: (0, 0))],
            out_specs=pl.BlockSpec((rows_pad, LANES), lambda i: (0, 0)),
            compiler_params=pltpu.CompilerParams(dimension_semantics=("arbitrary",)),
        )(params, w2)

    elif path == "cached":
        block_rows = min(
            _choose_block_rows(itemsize, CACHED_TILE_BYTES), max(8, (rows // 8) * 8)
        )
        nblk = -(-rows // block_rows)
        kernel = functools.partial(_cached_kernel, block_rows=block_rows)
        out2 = pl.pallas_call(
            kernel,
            out_shape=jax.ShapeDtypeStruct((rows_pad, LANES), orig_dtype),
            grid=(2, nblk),
            in_specs=[
                smem_spec,
                smem_spec,
                # phase 0: stream block i; phase 1: pin to last block (no re-DMA).
                pl.BlockSpec(
                    (block_rows, LANES),
                    lambda p, i: (i * (1 - p) + (nblk - 1) * p, 0),
                ),
            ],
            # phase 0: pinned to block 0 (never written -> never flushed); phase 1: block i.
            out_specs=pl.BlockSpec((block_rows, LANES), lambda p, i: (i * p, 0)),
            scratch_shapes=[
                pltpu.VMEM((nblk, block_rows, LANES), orig_dtype),  # whole-slab cache
                pltpu.VMEM((1, LANES), jnp.float32),                # |w|-sum partial accumulator
            ],
            compiler_params=pltpu.CompilerParams(
                dimension_semantics=("arbitrary", "arbitrary"),
                vmem_limit_bytes=vmem_limit,
            ),
        )(params, dims, w2)

    else:  # "stream": two passes, big tiles, both megacore-parallel.
        block_rows = min(
            _choose_block_rows(itemsize, STREAM_TILE_BYTES), max(8, (rows // 8) * 8)
        )
        nblk = -(-rows // block_rows)
        p1 = functools.partial(_partial_abs_sum_kernel, block_rows=block_rows)
        partials = pl.pallas_call(
            p1,
            out_shape=jax.ShapeDtypeStruct((nblk, 1, LANES), jnp.float32),
            grid=(nblk,),
            in_specs=[smem_spec, pl.BlockSpec((block_rows, LANES), lambda i: (i, 0))],
            out_specs=pl.BlockSpec((1, 1, LANES), lambda i: (i, 0, 0)),
            compiler_params=pltpu.CompilerParams(dimension_semantics=("parallel",)),
        )(dims, w2)
        total = jnp.sum(partials).reshape(1).astype(jnp.float32)

        out2 = pl.pallas_call(
            _mask_kernel,
            out_shape=jax.ShapeDtypeStruct((rows_pad, LANES), orig_dtype),
            grid=(nblk,),
            in_specs=[
                smem_spec,
                smem_spec,
                pl.BlockSpec((block_rows, LANES), lambda i: (i, 0)),
            ],
            out_specs=pl.BlockSpec((block_rows, LANES), lambda i: (i, 0)),
            compiler_params=pltpu.CompilerParams(dimension_semantics=("parallel",)),
        )(params, total, w2)

    out = out2.reshape(-1)
    if padded_n != n:
        out = out[:n]
    return out.reshape(orig_shape)


# ---------------------------------------------------------------------------
# Pure-JAX reference of the PyTorch auto_prune forward
# ---------------------------------------------------------------------------
def pruner_reference(w, *, alpha=0.01, beta=1.0, gamma=1.0, max_ratio=1.0, eps=1e-12):
    alpha_v = _auto_prune_param(alpha)
    beta_v = _auto_prune_param(beta)
    gamma_v = _auto_prune_param(gamma)
    ratio_v = _auto_prune_param(max_ratio)
    wf = w.astype(jnp.float32)
    w_abs = jnp.abs(wf)
    mean = jnp.mean(w_abs)
    log_w = jnp.log(jnp.maximum(eps, w_abs / (mean * gamma_v)))
    log_w = jnp.minimum(ratio_v, beta_v * log_w)
    mask = jnp.maximum(alpha_v / beta_v * log_w, log_w)
    return (wf * mask).astype(w.dtype)


if __name__ == "__main__":
    key = jax.random.PRNGKey(0)
    k1, k2, k3, k4, k5, k6 = jax.random.split(key, 6)

    # 1) Small NCHW conv-weight-like tensor -> fused whole-slab path, f32.
    w_small = jax.random.normal(k1, (2, 4, 16, 16), dtype=jnp.float32)
    out = jax.block_until_ready(pruner_forward(w_small))
    ref = pruner_reference(w_small)
    assert out.shape == w_small.shape and out.dtype == w_small.dtype
    assert jnp.allclose(out, ref, rtol=1e-4, atol=1e-5), "f32 fused mismatch"

    # 2) Small bf16 tensor (dtype casts fused inside the kernel).
    w_bf16 = jax.random.normal(k2, (2, 4, 16, 16), dtype=jnp.float32).astype(jnp.bfloat16)
    out_bf = jax.block_until_ready(pruner_forward(w_bf16))
    ref_bf = pruner_reference(w_bf16)
    assert out_bf.dtype == jnp.bfloat16
    assert jnp.allclose(
        out_bf.astype(jnp.float32), ref_bf.astype(jnp.float32), rtol=2e-2, atol=2e-2
    ), "bf16 fused mismatch"

    # 3) Ragged size (n % 128 != 0) exercising the lane-pad path.
    w_ragged = jax.random.normal(k3, (3, 5, 7, 11), dtype=jnp.float32)
    out_r = jax.block_until_ready(pruner_forward(w_ragged))
    ref_r = pruner_reference(w_ragged)
    assert jnp.allclose(out_r, ref_r, rtol=1e-4, atol=1e-5), "ragged mismatch"

    # 4) Mid-size tensor -> single-call two-phase VMEM-cached path (1 HBM read + 1 write).
    w_mid = jax.random.normal(k4, (8, 32, 64, 64), dtype=jnp.float32)
    out_m = jax.block_until_ready(pruner_forward(w_mid))
    ref_m = pruner_reference(w_mid)
    assert jnp.allclose(out_m, ref_m, rtol=1e-4, atol=1e-4), "cached-path mismatch"

    # 5) Same math forced through the streaming two-pass path (ragged row tail, no pad).
    w_str = jax.random.normal(k5, (8, 33, 64, 64), dtype=jnp.float32)
    out_s = jax.block_until_ready(pruner_forward(w_str, path="stream"))
    ref_s = pruner_reference(w_str)
    assert jnp.allclose(out_s, ref_s, rtol=1e-4, atol=1e-4), "stream-path mismatch"

    # 6) Forced cached path with a ragged row tail (rows % block_rows != 0, n % 128 == 0).
    w_rc = jax.random.normal(k6, (10, 103, 128), dtype=jnp.float32)
    out_rc = jax.block_until_ready(pruner_forward(w_rc, path="cached"))
    ref_rc = pruner_reference(w_rc)
    assert jnp.allclose(out_rc, ref_rc, rtol=1e-4, atol=1e-4), "cached ragged mismatch"

    print("KERNEL_OK")
</pallas_src>

<mosaic_0001>
module attributes {stable_mosaic.version = 11 : i64} {
  func.func @_fused_kernel(%arg0: i32, %arg1: memref<5xf32, #tpu.memory_space<smem>>, %arg2: memref<16x128xf32, #tpu.memory_space<vmem>>, %arg3: memref<16x128xf32, #tpu.memory_space<vmem>>) attributes {dimension_semantics = [#tpu.dimension_semantics<arbitrary>], iteration_bounds = array<i64: 1>, scalar_prefetch = 0 : i64, scratch_operands = 0 : i64, tpu.core_type = #tpu.core_type<tc>, window_params = [{transform_indices = @transform_0, window_bounds = array<i64: 5>}, {pipeline_mode = #tpu.pipeline_mode<synchronous>, transform_indices = @transform_1, window_bounds = array<i64: 16, 128>}, {pipeline_mode = #tpu.pipeline_mode<synchronous>, transform_indices = @transform_2, window_bounds = array<i64: 16, 128>}]} {
    %c0 = arith.constant 0 : index
    %0 = memref.load %arg1[%c0] : memref<5xf32, #tpu.memory_space<smem>>
    %c1 = arith.constant 1 : index
    %1 = memref.load %arg1[%c1] : memref<5xf32, #tpu.memory_space<smem>>
    %c2 = arith.constant 2 : index
    %2 = memref.load %arg1[%c2] : memref<5xf32, #tpu.memory_space<smem>>
    %c3 = arith.constant 3 : index
    %3 = memref.load %arg1[%c3] : memref<5xf32, #tpu.memory_space<smem>>
    %c4 = arith.constant 4 : index
    %4 = memref.load %arg1[%c4] : memref<5xf32, #tpu.memory_space<smem>>
    %c0_0 = arith.constant 0 : index
    %c0_1 = arith.constant 0 : index
    %5 = vector.load %arg2[%c0_0, %c0_1] : memref<16x128xf32, #tpu.memory_space<vmem>>, vector<16x128xf32>
    %6 = math.absf %5 : vector<16x128xf32>
    %7 = vector.shape_cast %6 : vector<16x128xf32> to vector<1x16x128xf32>
    %cst = arith.constant dense<0.000000e+00> : vector<1xf32>
    %8 = vector.multi_reduction <add>, %7, %cst [1, 2] : vector<1x16x128xf32> to vector<1xf32>
    %9 = vector.shape_cast %8 : vector<1xf32> to vector<1x1x1xf32>
    %10 = vector.extract %9[0, 0, 0] : f32 from vector<1x1x1xf32>
    %11 = arith.divf %4, %10 : f32
    %12 = math.absf %5 : vector<16x128xf32>
    %13 = vector.broadcast %11 : f32 to vector<16x128xf32>
    %14 = arith.mulf %12, %13 : vector<16x128xf32>
    %15 = vector.broadcast %3 : f32 to vector<16x128xf32>
    %16 = arith.maximumf %15, %14 : vector<16x128xf32>
    %17 = math.log %16 : vector<16x128xf32>
    %18 = vector.broadcast %1 : f32 to vector<16x128xf32>
    %19 = arith.mulf %18, %17 : vector<16x128xf32>
    %20 = vector.broadcast %2 : f32 to vector<16x128xf32>
    %21 = arith.minimumf %20, %19 : vector<16x128xf32>
    %22 = vector.broadcast %0 : f32 to vector<16x128xf32>
    %23 = arith.mulf %22, %21 : vector<16x128xf32>
    %24 = arith.maximumf %23, %21 : vector<16x128xf32>
    %25 = arith.mulf %5, %24 : vector<16x128xf32>
    %c0_2 = arith.constant 0 : index
    %c0_3 = arith.constant 0 : index
    %26 = vector.load %arg3[%c0_2, %c0_3] : memref<16x128xf32, #tpu.memory_space<vmem>>, vector<16x128xf32>
    tpu.vector_store %arg3[%c0_2, %c0_3], %25 {strides = array<i32>} : memref<16x128xf32, #tpu.memory_space<vmem>>, vector<16x128xf32>,
    return
  }
  func.func @transform_0(%arg0: i32) -> i32 {
    %c0_i32 = arith.constant 0 : i32
    %c0_i32_0 = arith.constant 0 : i32
    return %c0_i32 : i32
  }
  func.func @transform_1(%arg0: i32) -> (i32, i32) {
    %c0_i32 = arith.constant 0 : i32
    %c0_i32_0 = arith.constant 0 : i32
    %c0_i32_1 = arith.constant 0 : i32
    return %c0_i32, %c0_i32_0 : i32, i32
  }
  func.func @transform_2(%arg0: i32) -> (i32, i32) {
    %c0_i32 = arith.constant 0 : i32
    %c0_i32_0 = arith.constant 0 : i32
    %c0_i32_1 = arith.constant 0 : i32
    return %c0_i32, %c0_i32_0 : i32, i32
  }
}

</mosaic_0001>

<llo_original>
// kernel: pruner_forward.1
$region0: #{pruner_forward.1}
  #allocation0 [shape = 'u32[]', space=smem, size = 0x4, offset = 0x4, fixed_abs, tag = 'smem constant byte address 0x4 - core index']
  #allocation1 [shape = 'u32[144,128]{1,0:T(1,128)}', space=vmem, size = 0x12000, scoped, tag = 'internal scratch']
  %s0 = inlined_call_operand.vmem [shape: f32[5], index: 0, kind: input, shape index: {}]
  %s1 = inlined_call_operand.vmem [shape: f32[16,128], index: 1, kind: input, shape index: {}]
  %s2 = inlined_call_operand.vmem [shape: f32[16,128], index: 2, kind: output, shape index: {}]
  %s3 = sld [smem:[#allocation0]]
  $region22: #{pruner_forward.1} parent=0
    _
  %s5 = ssub.s32 1, %s3
  %s6 = scalar_select 0, %s5, %s3
  $region1: #{pruner_forward.1} parent=0
    #allocation2 [shape = 'u8[512]{0}', space=smem, size = 0x200, scoped, tag = 'input window, operand 0, single buffered']
    #allocation3 [shape = 's32[1]{0}', space=sflag, size = 0x4, scoped, tag = 'scoped memory for pruner_forward.1']
    %7 = vsyncpa [#allocation3], 0
    // Predicated region
    $region2: #{pruner_forward.1} parent=1 // pred_check
      _
    $region3: #{pruner_forward.1} parent=1 // pred_check_branch
      %9 = sbr.rel (0) target = $region5
    $region4: #{pruner_forward.1} parent=1 // pred_region
      %s11 = ssub.s32 16, 16
      %12 = vsyncadd [#allocation3], %s11
      %s14 = sshll.u32 %s0, 4
      %s15 = int_to_ptr.vmem [resolvable:$true] %s14
      %17 = dma.vmem_to_smem %s15, 16, [#allocation2], [#allocation3]
    $region5: #{pruner_forward.1} parent=1 // pred_fallthru
      _
    // Predicated region
    $region6: #{pruner_forward.1} parent=1 // pred_check
      _
    $region7: #{pruner_forward.1} parent=1 // pred_check_branch
      %19 = sbr.rel (0) target = $region9
    $region8: #{pruner_forward.1} parent=1 // pred_region
      _
    $region9: #{pruner_forward.1} parent=1 // pred_fallthru
      _
    // Predicated region
    $region10: #{pruner_forward.1} parent=1 // pred_check
      _
    $region11: #{pruner_forward.1} parent=1 // pred_check_branch
      %21 = sbr.rel (0) target = $region13
    $region12: #{pruner_forward.1} parent=1 // pred_region
      %22 = dma.done [#allocation3], 16
    $region13: #{pruner_forward.1} parent=1 // pred_fallthru
      _
    %23 = sfence
    %s24 = sld [smem:[#allocation2]]
    %s25 = sld [smem:[#allocation2 + $0x1]]
    %s26 = sld [smem:[#allocation2 + $0x2]]
    %s27 = sld [smem:[#allocation2 + $0x3]]
    %s28 = sld [smem:[#allocation2 + $0x4]]
    %v29 = vld [vmem:[%s1] sm:$0xff]
    %v30 = vld [vmem:[%s1 + $0x8] sm:$0xff]
    %v31 = vand.u32 2147483647, %v29
    %v32 = vand.u32 2147483647, %v30
    %v33 = vadd.f32 %v31, %v32
    %34 = vadd.xlane.f32.xlu0 %v33
    %v35 = vpop.xlane.xlu0 %34
    %v36 = vrot.slane %v35, 4
    %v37 = vadd.f32 %v35, %v36
    %v38 = vrot.slane %v37, 2
    %v39 = vadd.f32 %v37, %v38
    %v40 = vrot.slane %v39, 1
    %v41 = vadd.f32 %v39, %v40
    %s42 = vtos %v41
    %v43 = vstv %s42
    %v44 = vrcp.pop %v43
    %s45 = vtos %v44
    %s46 = smul.f32 %s28, %s45
    %v47 = vstv %s46
    %v48 = vmul.f32 %v31, %v47
    %v49 = vmul.f32 %v32, %v47
    %v50 = vstv %s27
    %v51 = vmax.f32 %v50, %v48
    %v52 = vmax.f32 %v50, %v49
    %v53 = vlog2.pop %v51
    %v54 = vmul.f32 %v53, 0.6931472
    %v55 = vlog2.pop %v52
    %v56 = vmul.f32 %v55, 0.6931472
    %v57 = vstv %s25
    %v58 = vmul.f32 %v57, %v54
    %v59 = vmul.f32 %v57, %v56
    %v60 = vstv %s26
    %v61 = vmin.f32 %v60, %v58
    %v62 = vmin.f32 %v60, %v59
    %v63 = vstv %s24
    %v64 = vmul.f32 %v63, %v61
    %v65 = vmul.f32 %v63, %v62
    %v66 = vmax.f32 %v64, %v61
    %v67 = vmax.f32 %v65, %v62
    %v68 = vmul.f32 %v29, %v66
    %v69 = vmul.f32 %v30, %v67
    %70 = vst [vmem:[%s2] sm:$0xff] %v68
    %71 = vst [vmem:[%s2 + $0x8] sm:$0xff] %v69
    // Predicated region
    $region14: #{pruner_forward.1} parent=1 // pred_check
      _
    $region15: #{pruner_forward.1} parent=1 // pred_check_branch
      %73 = sbr.rel (0) target = $region17
    $region16: #{pruner_forward.1} parent=1 // pred_region
      _
    $region17: #{pruner_forward.1} parent=1 // pred_fallthru
      _
    // Predicated region
    $region18: #{pruner_forward.1} parent=1 // pred_check
      _
    $region19: #{pruner_forward.1} parent=1 // pred_check_branch
      %75 = sbr.rel (0) target = $region21
    $region20: #{pruner_forward.1} parent=1 // pred_region
      _
    $region21: #{pruner_forward.1} parent=1 // pred_fallthru
      _
    %76 = vsyncpa [#allocation3], 1

</llo_original>
